<compile_context>
chip_gen: v6e
topology: v6e:2x2x1
jax: 0.10.0
libtpu: 0.0.40
codegen_flags: <defaults>
</compile_context>

<pallas_src>
import functools

import numpy as np
import jax
import jax.numpy as jnp
from jax.experimental import pallas as pl
from jax.experimental.pallas import tpu as pltpu

LEAKY_SLOPE = 0.01  # PyTorch nn.LeakyReLU default


def _leaky(v):
    # max(v, a*v) == LeakyReLU(v) for slope a in (0, 1); 2 VALU ops.
    return jnp.maximum(v, LEAKY_SLOPE * v)


def _deepset_kernel(x_ref, w1_ref, w23_ref, w4_ref, b_ref, o_ref,
                    *, n_set, dim_hidden, dim_output):
    # x_ref:   (TB, n_set*4)          one batch tile, lane-dense
    # w1_ref:  (n_set*4, n_set*H)     block-diagonal enc layer 1
    # w23_ref: (n_set*H, H)           vstack([W2@W3]*n_set)  (set-sum folded in)
    # w4_ref:  (H, dim_output)
    # b_ref:   (3, maxw) f32          row0: tile(b1,n_set), row1: b23, row2: b4
    # o_ref:   (TB, dim_output)
    cdt = w1_ref.dtype  # MXU input dtype (f32 or bf16); accumulation stays f32
    nh = n_set * dim_hidden

    b1t = b_ref[0:1, :nh]
    b23 = b_ref[1:2, :dim_hidden]
    b4 = b_ref[2:3, :dim_output]

    # enc layer 1 (all set elements at once) + LeakyReLU
    h = _leaky(jnp.dot(x_ref[...], w1_ref[...],
                       preferred_element_type=jnp.float32) + b1t)
    # set sum + enc layer 2 + dec layer 1, all folded into one matmul,
    # then dec's first LeakyReLU
    s = _leaky(jnp.dot(h.astype(cdt), w23_ref[...],
                       preferred_element_type=jnp.float32) + b23)
    # dec layer 2 + LeakyReLU
    d = _leaky(jnp.dot(s.astype(cdt), w4_ref[...],
                       preferred_element_type=jnp.float32) + b4)

    o_ref[...] = d.astype(o_ref.dtype)


def deepset_encoder(state, params, num_agent, *, block_b=2048,
                    compute_dtype=jnp.float32, out_dtype=jnp.float32):
    """state: (..., (num_agent-1)*4) float32 -> (B, 256) out_dtype."""
    n_set = num_agent - 1
    (w1, b1), (w2, b2), (w3, b3), (w4, b4) = params
    dim_hidden = w1.shape[1]
    dim_output = w4.shape[1]

    # ---- weight / bias prep (once, in f32) ---------------------------------
    # Block-diagonal enc layer 1: x2d @ W1bd == concat_n(x_n @ W1)
    w1bd = jnp.kron(jnp.eye(n_set, dtype=jnp.float32),
                    jnp.asarray(w1, jnp.float32))           # (n_set*4, n_set*H)
    # Fuse enc layer 2 with dec layer 1 (no nonlinearity in between; the set
    # sum is linear): W23 = W2@W3, b23 = n_set*(b2@W3) + b3.  Fold the set sum
    # into the weight by vertical stacking.
    w2f = jnp.asarray(w2, jnp.float32)
    w3f = jnp.asarray(w3, jnp.float32)
    w23 = w2f @ w3f                                           # (H, H) f32
    w23s = jnp.tile(w23, (n_set, 1))                          # (n_set*H, H)
    b2f = jnp.asarray(b2, jnp.float32).reshape(1, -1)
    b3f = jnp.asarray(b3, jnp.float32).reshape(1, -1)
    b23 = float(n_set) * (b2f @ w3f) + b3f                    # (1, H)
    b1t = jnp.tile(jnp.asarray(b1, jnp.float32).reshape(1, -1), (1, n_set))
    b4f = jnp.asarray(b4, jnp.float32).reshape(1, -1)

    maxw = max(n_set * dim_hidden, dim_hidden, dim_output)

    def _pad_bias(b):
        return jnp.pad(b, ((0, 0), (0, maxw - b.shape[1])))

    b_pack = jnp.concatenate(
        [_pad_bias(b1t), _pad_bias(b23), _pad_bias(b4f)], axis=0)  # (3, maxw)

    w1c = w1bd.astype(compute_dtype)
    w23c = w23s.astype(compute_dtype)
    w4c = jnp.asarray(w4, jnp.float32).astype(compute_dtype)

    # ---- input layout + batch tiling ---------------------------------------
    x = state.reshape(-1, n_set * 4).astype(compute_dtype)    # lane-dense 2-D
    B = x.shape[0]

    if B > block_b:
        TB = block_b                                   # multiple of 8
    elif B >= 16:
        # ensure >= 2 grid blocks so v7x megacore ("parallel") shards the
        # batch across both TensorCores; round to the sublane multiple.
        TB = -(-(-(-B // 2)) // 8) * 8
    else:
        TB = B                                         # single full-size block
    n_blocks = -(-B // TB)
    B_pad = n_blocks * TB
    if B_pad != B:
        x = jnp.pad(x, ((0, B_pad - B), (0, 0)))
    # TODO(synk): a masked last block (scalar-prefetched B) would avoid this
    # padding copy for ragged B; the input stream is small so it is minor.

    kernel = functools.partial(_deepset_kernel, n_set=n_set,
                               dim_hidden=dim_hidden, dim_output=dim_output)
    const2 = lambda i: (0, 0)

    out = pl.pallas_call(
        kernel,
        out_shape=jax.ShapeDtypeStruct((B_pad, dim_output), out_dtype),
        grid=(n_blocks,),
        in_specs=[
            pl.BlockSpec((TB, n_set * 4), lambda i: (i, 0)),   # x tile
            pl.BlockSpec(w1c.shape, const2),                   # block-diag W1
            pl.BlockSpec(w23c.shape, const2),                  # stacked W2@W3
            pl.BlockSpec(w4c.shape, const2),                   # W4
            pl.BlockSpec(b_pack.shape, const2),                # packed biases
        ],
        out_specs=pl.BlockSpec((TB, dim_output), lambda i: (i, 0)),
        compiler_params=pltpu.CompilerParams(
            dimension_semantics=("parallel",)),
    )(x, w1c, w23c, w4c, b_pack)

    return out[:B]


def _linear_params(key, fan_in, fan_out):
    # PyTorch nn.Linear default init: U(-1/sqrt(fan_in), 1/sqrt(fan_in)).
    # Weights stored (in, out) so y = x @ W + b matches torch's x @ W.T.
    kw, kb = jax.random.split(key)
    bound = 1.0 / np.sqrt(fan_in)
    w = jax.random.uniform(kw, (fan_in, fan_out), jnp.float32, -bound, bound)
    b = jax.random.uniform(kb, (1, fan_out), jnp.float32, -bound, bound)
    return w, b


def _reference(state, params, num_agent):
    n_set = num_agent - 1
    (w1, b1), (w2, b2), (w3, b3), (w4, b4) = params
    x = state.reshape(-1, n_set, 4)
    h = jnp.where(x @ w1 + b1 > 0, x @ w1 + b1, LEAKY_SLOPE * (x @ w1 + b1))
    h = h @ w2 + b2
    s = h.sum(-2)
    d = s @ w3 + b3
    d = jnp.where(d > 0, d, LEAKY_SLOPE * d)
    d = d @ w4 + b4
    d = jnp.where(d > 0, d, LEAKY_SLOPE * d)
    return d


if __name__ == "__main__":
    num_agent = 9            # -> set size 8
    dim_input = 4
    dim_hidden = 32
    dim_output = 256
    B = 2

    root = jax.random.PRNGKey(0)
    k_in, k1, k2, k3, k4 = jax.random.split(root, 5)

    params = (
        _linear_params(k1, dim_input, dim_hidden),
        _linear_params(k2, dim_hidden, dim_hidden),
        _linear_params(k3, dim_hidden, dim_hidden),
        _linear_params(k4, dim_hidden, dim_output),
    )

    # state shaped like the flat observation the module would receive
    state = jax.random.normal(k_in, (B, (num_agent - 1) * dim_input),
                              jnp.float32)

    ref = _reference(state, params, num_agent)

    # f32 path: matches the PyTorch-style reference to tight tolerance
    out = jax.block_until_ready(deepset_encoder(state, params, num_agent))
    np.testing.assert_allclose(np.asarray(out), np.asarray(ref),
                               rtol=1e-5, atol=1e-5)

    # bf16-operand path (halves B-scaled HBM bytes on v5e/v6e); f32 accumulate
    out_bf16 = jax.block_until_ready(
        deepset_encoder(state, params, num_agent,
                        compute_dtype=jnp.bfloat16, out_dtype=jnp.bfloat16))
    np.testing.assert_allclose(np.asarray(out_bf16, dtype=np.float32),
                               np.asarray(ref), rtol=5e-2, atol=5e-2)

    # larger / ragged batch to exercise the multi-block + padded-tail path
    B2 = 300
    state2 = jax.random.normal(k_in, (B2, (num_agent - 1) * dim_input),
                               jnp.float32)
    ref2 = _reference(state2, params, num_agent)
    out2 = jax.block_until_ready(deepset_encoder(state2, params, num_agent))
    np.testing.assert_allclose(np.asarray(out2), np.asarray(ref2),
                               rtol=1e-5, atol=1e-5)

    print("KERNEL_OK")
</pallas_src>

<mosaic_0001>
module attributes {stable_mosaic.version = 11 : i64} {
  func.func @_deepset_kernel(%arg0: i32, %arg1: memref<2x32xf32, #tpu.memory_space<vmem>>, %arg2: memref<32x256xf32, #tpu.memory_space<vmem>>, %arg3: memref<256x32xf32, #tpu.memory_space<vmem>>, %arg4: memref<32x256xf32, #tpu.memory_space<vmem>>, %arg5: memref<3x256xf32, #tpu.memory_space<vmem>>, %arg6: memref<2x256xf32, #tpu.memory_space<vmem>>) attributes {dimension_semantics = [#tpu.dimension_semantics<parallel>], iteration_bounds = array<i64: 1>, scalar_prefetch = 0 : i64, scratch_operands = 0 : i64, tpu.core_type = #tpu.core_type<tc>, window_params = [{transform_indices = @transform_0, window_bounds = array<i64: 2, 32>}, {pipeline_mode = #tpu.pipeline_mode<synchronous>, transform_indices = @transform_1, window_bounds = array<i64: 32, 256>}, {pipeline_mode = #tpu.pipeline_mode<synchronous>, transform_indices = @transform_2, window_bounds = array<i64: 256, 32>}, {pipeline_mode = #tpu.pipeline_mode<synchronous>, transform_indices = @transform_3, window_bounds = array<i64: 32, 256>}, {pipeline_mode = #tpu.pipeline_mode<synchronous>, transform_indices = @transform_4, window_bounds = array<i64: 3, 256>}, {transform_indices = @transform_5, window_bounds = array<i64: 2, 256>}]} {
    %c0 = arith.constant 0 : index
    %c0_0 = arith.constant 0 : index
    %0 = vector.load %arg5[%c0, %c0_0] : memref<3x256xf32, #tpu.memory_space<vmem>>, vector<1x256xf32>
    %c1 = arith.constant 1 : index
    %c0_1 = arith.constant 0 : index
    %1 = vector.load %arg5[%c1, %c0_1] : memref<3x256xf32, #tpu.memory_space<vmem>>, vector<1x32xf32>
    %c2 = arith.constant 2 : index
    %c0_2 = arith.constant 0 : index
    %2 = vector.load %arg5[%c2, %c0_2] : memref<3x256xf32, #tpu.memory_space<vmem>>, vector<1x256xf32>
    %c0_3 = arith.constant 0 : index
    %c0_4 = arith.constant 0 : index
    %3 = vector.load %arg1[%c0_3, %c0_4] : memref<2x32xf32, #tpu.memory_space<vmem>>, vector<2x32xf32>
    %c0_5 = arith.constant 0 : index
    %c0_6 = arith.constant 0 : index
    %4 = vector.load %arg2[%c0_5, %c0_6] : memref<32x256xf32, #tpu.memory_space<vmem>>, vector<32x256xf32>
    %cst = arith.constant dense<0.000000e+00> : vector<2x256xf32>
    %5 = tpu.matmul %3, %4, %cst {dimension_numbers = #tpu.dot_dimension_numbers<[1], [0], [0], [1], [0, 0, 1, 1], [], []>} : vector<2x32xf32>, vector<32x256xf32>, vector<2x256xf32> -> vector<2x256xf32>
    %6 = vector.broadcast %0 : vector<1x256xf32> to vector<2x256xf32>
    %7 = arith.addf %5, %6 : vector<2x256xf32>
    %cst_7 = arith.constant 0.00999999977 : f32
    %8 = vector.broadcast %cst_7 : f32 to vector<2x256xf32>
    %9 = arith.mulf %8, %7 : vector<2x256xf32>
    %10 = arith.maximumf %7, %9 : vector<2x256xf32>
    %c0_8 = arith.constant 0 : index
    %c0_9 = arith.constant 0 : index
    %11 = vector.load %arg3[%c0_8, %c0_9] : memref<256x32xf32, #tpu.memory_space<vmem>>, vector<256x32xf32>
    %cst_10 = arith.constant dense<0.000000e+00> : vector<2x32xf32>
    %12 = tpu.matmul %10, %11, %cst_10 {dimension_numbers = #tpu.dot_dimension_numbers<[1], [0], [0], [1], [0, 0, 1, 1], [], []>} : vector<2x256xf32>, vector<256x32xf32>, vector<2x32xf32> -> vector<2x32xf32>
    %13 = vector.broadcast %1 : vector<1x32xf32> to vector<2x32xf32>
    %14 = arith.addf %12, %13 : vector<2x32xf32>
    %cst_11 = arith.constant 0.00999999977 : f32
    %15 = vector.broadcast %cst_11 : f32 to vector<2x32xf32>
    %16 = arith.mulf %15, %14 : vector<2x32xf32>
    %17 = arith.maximumf %14, %16 : vector<2x32xf32>
    %c0_12 = arith.constant 0 : index
    %c0_13 = arith.constant 0 : index
    %18 = vector.load %arg4[%c0_12, %c0_13] : memref<32x256xf32, #tpu.memory_space<vmem>>, vector<32x256xf32>
    %cst_14 = arith.constant dense<0.000000e+00> : vector<2x256xf32>
    %19 = tpu.matmul %17, %18, %cst_14 {dimension_numbers = #tpu.dot_dimension_numbers<[1], [0], [0], [1], [0, 0, 1, 1], [], []>} : vector<2x32xf32>, vector<32x256xf32>, vector<2x256xf32> -> vector<2x256xf32>
    %20 = vector.broadcast %2 : vector<1x256xf32> to vector<2x256xf32>
    %21 = arith.addf %19, %20 : vector<2x256xf32>
    %cst_15 = arith.constant 0.00999999977 : f32
    %22 = vector.broadcast %cst_15 : f32 to vector<2x256xf32>
    %23 = arith.mulf %22, %21 : vector<2x256xf32>
    %24 = arith.maximumf %21, %23 : vector<2x256xf32>
    %c0_16 = arith.constant 0 : index
    %c0_17 = arith.constant 0 : index
    %25 = vector.load %arg6[%c0_16, %c0_17] : memref<2x256xf32, #tpu.memory_space<vmem>>, vector<2x256xf32>
    tpu.vector_store %arg6[%c0_16, %c0_17], %24 {strides = array<i32>} : memref<2x256xf32, #tpu.memory_space<vmem>>, vector<2x256xf32>,
    return
  }
  func.func @transform_0(%arg0: i32) -> (i32, i32) {
    %c0_i32 = arith.constant 0 : i32
    %c0_i32_0 = arith.constant 0 : i32
    return %arg0, %c0_i32 : i32, i32
  }
  func.func @transform_1(%arg0: i32) -> (i32, i32) {
    %c0_i32 = arith.constant 0 : i32
    %c0_i32_0 = arith.constant 0 : i32
    %c0_i32_1 = arith.constant 0 : i32
    return %c0_i32, %c0_i32_0 : i32, i32
  }
  func.func @transform_2(%arg0: i32) -> (i32, i32) {
    %c0_i32 = arith.constant 0 : i32
    %c0_i32_0 = arith.constant 0 : i32
    %c0_i32_1 = arith.constant 0 : i32
    return %c0_i32, %c0_i32_0 : i32, i32
  }
  func.func @transform_3(%arg0: i32) -> (i32, i32) {
    %c0_i32 = arith.constant 0 : i32
    %c0_i32_0 = arith.constant 0 : i32
    %c0_i32_1 = arith.constant 0 : i32
    return %c0_i32, %c0_i32_0 : i32, i32
  }
  func.func @transform_4(%arg0: i32) -> (i32, i32) {
    %c0_i32 = arith.constant 0 : i32
    %c0_i32_0 = arith.constant 0 : i32
    %c0_i32_1 = arith.constant 0 : i32
    return %c0_i32, %c0_i32_0 : i32, i32
  }
  func.func @transform_5(%arg0: i32) -> (i32, i32) {
    %c0_i32 = arith.constant 0 : i32
    %c0_i32_0 = arith.constant 0 : i32
    return %arg0, %c0_i32 : i32, i32
  }
}

</mosaic_0001>

<llo_original>
// kernel: tpu_custom_call.1
$region0: #{tpu_custom_call.1}
  #allocation0 [shape = 'u32[]', space=smem, size = 0x4, offset = 0x4, fixed_abs, tag = 'smem constant byte address 0x4 - core index']
  #allocation1 [shape = 'u32[144,128]{1,0:T(1,128)}', space=vmem, size = 0x12000, scoped, tag = 'internal scratch']
  %s0 = inlined_call_operand.vmem [shape: f32[2,32], index: 0, kind: input, shape index: {}]
  %s1 = inlined_call_operand.vmem [shape: f32[32,256], index: 1, kind: input, shape index: {}]
  %s2 = inlined_call_operand.vmem [shape: f32[256,32], index: 2, kind: input, shape index: {}]
  %s3 = inlined_call_operand.vmem [shape: f32[32,256], index: 3, kind: input, shape index: {}]
  %s4 = inlined_call_operand.vmem [shape: f32[3,256], index: 4, kind: input, shape index: {}]
  %s5 = inlined_call_operand.hbm [shape: f32[2,256], index: 5, kind: output, shape index: {}]
  %s6 = sld [smem:[#allocation0]]
  $region30: #{tpu_custom_call.1} parent=0
    _
  %s8 = ssub.s32 1, %s6
  %s9 = scalar_select 0, %s8, %s6
  $region1: #{tpu_custom_call.1} parent=0
    #allocation2 [shape = 'u8[2048]{0}', space=vmem, size = 0x800, scoped, tag = 'output window, operand 0, single buffered']
    #allocation3 [shape = 's32[1]{0}', space=sflag, size = 0x4, scoped, tag = 'scoped memory for tpu_custom_call.1']
    %10 = vsyncpa [#allocation3], 0
    // Predicated region
    $region2: #{tpu_custom_call.1} parent=1 // pred_check
      _
    $region3: #{tpu_custom_call.1} parent=1 // pred_check_branch
      %12 = sbr.rel (0) target = $region5
    $region4: #{tpu_custom_call.1} parent=1 // pred_region
      _
    $region5: #{tpu_custom_call.1} parent=1 // pred_fallthru
      _
    // Predicated region
    $region6: #{tpu_custom_call.1} parent=1 // pred_check
      _
    $region7: #{tpu_custom_call.1} parent=1 // pred_check_branch
      %14 = sbr.rel (0) target = $region9
    $region8: #{tpu_custom_call.1} parent=1 // pred_region
      _
    $region9: #{tpu_custom_call.1} parent=1 // pred_fallthru
      _
    // Predicated region
    $region10: #{tpu_custom_call.1} parent=1 // pred_check
      _
    $region11: #{tpu_custom_call.1} parent=1 // pred_check_branch
      %16 = sbr.rel (0) target = $region13
    $region12: #{tpu_custom_call.1} parent=1 // pred_region
      _
    $region13: #{tpu_custom_call.1} parent=1 // pred_fallthru
      _
    // Predicated region
    $region14: #{tpu_custom_call.1} parent=1 // pred_check
      _
    $region15: #{tpu_custom_call.1} parent=1 // pred_check_branch
      %18 = sbr.rel (0) target = $region17
    $region16: #{tpu_custom_call.1} parent=1 // pred_region
      _
    $region17: #{tpu_custom_call.1} parent=1 // pred_fallthru
      _
    // Predicated region
    $region18: #{tpu_custom_call.1} parent=1 // pred_check
      _
    $region19: #{tpu_custom_call.1} parent=1 // pred_check_branch
      %20 = sbr.rel (0) target = $region21
    $region20: #{tpu_custom_call.1} parent=1 // pred_region
      _
    $region21: #{tpu_custom_call.1} parent=1 // pred_fallthru
      _
    %v21 = vld [vmem:[%s4] ss:$4 sm:$0x3]
    %v22 = vld [vmem:[%s4 + $0x1] sm:$0x1]
    %s23 = scalar_lea.vmem %s4, 2
    %v24 = vld [vmem:[%s23] ss:$4 sm:$0x3]
    %v25 = vld [vmem:[%s0] sm:$0x3]
    %v26 = vld [vmem:[%s1] sm:$0xff]
    %v27 = vld [vmem:[%s1 + $0x8] sm:$0xff]
    %v28 = vld [vmem:[%s1 + $0x10] sm:$0xff]
    %v29 = vld [vmem:[%s1 + $0x18] sm:$0xff]
    %v30 = vld [vmem:[%s1 + $0x20] sm:$0xff]
    %v31 = vld [vmem:[%s1 + $0x28] sm:$0xff]
    %v32 = vld [vmem:[%s1 + $0x30] sm:$0xff]
    %v33 = vld [vmem:[%s1 + $0x38] sm:$0xff]
    %v35 = vlaneseq
    %v36 = vshrl.u32 %v35, 7
    %v37 = vsub.s32 0, %v36
    %v38 = vrot.slane %v21, %v37
    %v39 = vlaneseq
    %v40 = vshrl.u32 %v39, 7
    %v41 = vsub.s32 1, %v40
    %v42 = vrot.slane %v21, %v41
    %vm45 = vcmask 261120
    %v47 = vsel %vm45, %v25, 0
    %49 = vmatprep.subr.mxu0 0.0
    %50 = vmatpush1.msra.mxu0 0.0
    %51 = vmatprep.subr.mxu0 0.0
    %52 = vmatpush1.msra.mxu0 0.0
    %53 = vmatprep.subr.mxu0 0.0
    %54 = vmatpush1.msra.mxu0 0.0
    %55 = vmatprep.subr.mxu0 0.0
    %56 = vmatpush1.msra.mxu0 0.0
    %57 = vmatprep.subr.mxu0 0.0
    %58 = vmatpush1.msra.mxu0 0.0
    %59 = vmatprep.subr.mxu0 0.0
    %60 = vmatpush1.msra.mxu0 0.0
    %61 = vmatprep.subr.mxu0 0.0
    %62 = vmatpush1.msra.mxu0 0.0
    %63 = vmatprep.subr.mxu0 0.0
    %64 = vmatpush1.msra.mxu0 0.0
    %65 = vmatprep.subr.mxu0 0.0
    %66 = vmatpush1.msra.mxu0 0.0
    %67 = vmatprep.subr.mxu0 0.0
    %68 = vmatpush1.msra.mxu0 0.0
    %69 = vmatprep.subr.mxu0 0.0
    %70 = vmatpush1.msra.mxu0 0.0
    %71 = vmatprep.subr.mxu0 0.0
    %72 = vmatpush1.msra.mxu0 0.0
    %73 = vmatprep.subr.mxu0 %v33
    %74 = vmatpush1.msra.mxu0 %v32
    %75 = vmatprep.subr.mxu0 %v31
    %76 = vmatpush1.msra.mxu0 %v30
    %77 = vmatprep.subr.mxu0 %v29
    %78 = vmatpush1.msra.mxu0 %v28
    %79 = vmatprep.subr.mxu0 %v27
    %80 = vmatpush1.msra.mxu0 %v26
    %81 = vmatprep.subr.mxu0 0.0
    %82 = vmatpush2.msra.mxu0 0.0
    %83 = vmatprep.subr.mxu0 0.0
    %84 = vmatpush2.msra.mxu0 0.0
    %85 = vmatprep.subr.mxu0 0.0
    %86 = vmatpush2.msra.mxu0 0.0
    %87 = vmatprep.subr.mxu0 0.0
    %88 = vmatpush2.msra.mxu0 0.0
    %89 = vmatprep.subr.mxu0 0.0
    %90 = vmatpush2.msra.mxu0 0.0
    %91 = vmatprep.subr.mxu0 0.0
    %92 = vmatpush2.msra.mxu0 0.0
    %93 = vmatprep.subr.mxu0 0.0
    %94 = vmatpush2.msra.mxu0 0.0
    %95 = vmatprep.subr.mxu0 0.0
    %96 = vmatpush2.msra.mxu0 0.0
    %97 = vmatprep.subr.mxu0 0.0
    %98 = vmatpush2.msra.mxu0 0.0
    %99 = vmatprep.subr.mxu0 0.0
    %100 = vmatpush2.msra.mxu0 0.0
    %101 = vmatprep.subr.mxu0 0.0
    %102 = vmatpush2.msra.mxu0 0.0
    %103 = vmatprep.subr.mxu0 0.0
    %104 = vmatpush2.msra.mxu0 0.0
    %105 = vmatprep.subr.mxu0 0.0
    %106 = vmatpush2.msra.mxu0 0.0
    %107 = vmatprep.subr.mxu0 0.0
    %108 = vmatpush2.msra.mxu0 0.0
    %109 = vmatprep.subr.mxu0 0.0
    %110 = vmatpush2.msra.mxu0 0.0
    %111 = vmatprep.subr.mxu0 0.0
    %112 = vmatpush2.msra.mxu0 0.0
    %113 = vmatprep.mubr.f32.mxu0 0.0
    %114 = vmatmul.mubr.f32.gmra.mxu0 %v47
    %v115 = vpop.f32.mrf.mxu0
    %v116 = vadd.f32 %v38, %v115
    %v117 = vpop.f32.mrf.mxu0
    %v118 = vadd.f32 %v42, %v117
    %119 = vdwg.mxu0
    %v120 = vmul.f32 %v116, 0.01
    %v121 = vmul.f32 %v118, 0.01
    %v122 = vmax.f32 %v116, %v120
    %v123 = vmax.f32 %v118, %v121
    %v124 = vld [vmem:[%s2] sm:$0xff]
    %v125 = vld [vmem:[%s2 + $0x8] sm:$0xff]
    %v126 = vld [vmem:[%s2 + $0x10] sm:$0xff]
    %v127 = vld [vmem:[%s2 + $0x18] sm:$0xff]
    %v128 = vld [vmem:[%s2 + $0x20] sm:$0xff]
    %v129 = vld [vmem:[%s2 + $0x28] sm:$0xff]
    %v130 = vld [vmem:[%s2 + $0x30] sm:$0xff]
    %v131 = vld [vmem:[%s2 + $0x38] sm:$0xff]
    %v132 = vld [vmem:[%s2 + $0x40] sm:$0xff]
    %v133 = vld [vmem:[%s2 + $0x48] sm:$0xff]
    %v134 = vld [vmem:[%s2 + $0x50] sm:$0xff]
    %v135 = vld [vmem:[%s2 + $0x58] sm:$0xff]
    %v136 = vld [vmem:[%s2 + $0x60] sm:$0xff]
    %v137 = vld [vmem:[%s2 + $0x68] sm:$0xff]
    %v138 = vld [vmem:[%s2 + $0x70] sm:$0xff]
    %v139 = vld [vmem:[%s2 + $0x78] sm:$0xff]
    %v140 = vld [vmem:[%s2 + $0x80] sm:$0xff]
    %v141 = vld [vmem:[%s2 + $0x88] sm:$0xff]
    %v142 = vld [vmem:[%s2 + $0x90] sm:$0xff]
    %v143 = vld [vmem:[%s2 + $0x98] sm:$0xff]
    %v144 = vld [vmem:[%s2 + $0xa0] sm:$0xff]
    %v145 = vld [vmem:[%s2 + $0xa8] sm:$0xff]
    %v146 = vld [vmem:[%s2 + $0xb0] sm:$0xff]
    %v147 = vld [vmem:[%s2 + $0xb8] sm:$0xff]
    %v148 = vld [vmem:[%s2 + $0xc0] sm:$0xff]
    %v149 = vld [vmem:[%s2 + $0xc8] sm:$0xff]
    %v150 = vld [vmem:[%s2 + $0xd0] sm:$0xff]
    %v151 = vld [vmem:[%s2 + $0xd8] sm:$0xff]
    %v152 = vld [vmem:[%s2 + $0xe0] sm:$0xff]
    %v153 = vld [vmem:[%s2 + $0xe8] sm:$0xff]
    %v154 = vld [vmem:[%s2 + $0xf0] sm:$0xff]
    %v155 = vld [vmem:[%s2 + $0xf8] sm:$0xff]
    %v156 = vlaneseq
    %v157 = vshrl.u32 %v156, 7
    %v158 = vsub.s32 0, %v157
    %v159 = vrot.slane %v22, %v158
    %160 = vmatprep.subr.mxu0 0.0
    %161 = vmatpush1.msra.mxu0 %v139
    %162 = vmatprep.subr.mxu0 0.0
    %163 = vmatpush1.msra.mxu0 %v138
    %164 = vmatprep.subr.mxu0 0.0
    %165 = vmatpush1.msra.mxu0 %v137
    %166 = vmatprep.subr.mxu0 0.0
    %167 = vmatpush1.msra.mxu0 %v136
    %168 = vmatprep.subr.mxu0 0.0
    %169 = vmatpush1.msra.mxu0 %v135
    %170 = vmatprep.subr.mxu0 0.0
    %171 = vmatpush1.msra.mxu0 %v134
    %172 = vmatprep.subr.mxu0 0.0
    %173 = vmatpush1.msra.mxu0 %v133
    %174 = vmatprep.subr.mxu0 0.0
    %175 = vmatpush1.msra.mxu0 %v132
    %176 = vmatprep.subr.mxu0 0.0
    %177 = vmatpush1.msra.mxu0 %v131
    %178 = vmatprep.subr.mxu0 0.0
    %179 = vmatpush1.msra.mxu0 %v130
    %180 = vmatprep.subr.mxu0 0.0
    %181 = vmatpush1.msra.mxu0 %v129
    %182 = vmatprep.subr.mxu0 0.0
    %183 = vmatpush1.msra.mxu0 %v128
    %184 = vmatprep.subr.mxu0 0.0
    %185 = vmatpush1.msra.mxu0 %v127
    %186 = vmatprep.subr.mxu0 0.0
    %187 = vmatpush1.msra.mxu0 %v126
    %188 = vmatprep.subr.mxu0 0.0
    %189 = vmatpush1.msra.mxu0 %v125
    %190 = vmatprep.subr.mxu0 0.0
    %191 = vmatpush1.msra.mxu0 %v124
    %192 = vmatprep.subr.mxu0 0.0
    %193 = vmatpush2.msra.mxu0 %v155
    %194 = vmatprep.subr.mxu0 0.0
    %195 = vmatpush2.msra.mxu0 %v154
    %196 = vmatprep.subr.mxu0 0.0
    %197 = vmatpush2.msra.mxu0 %v153
    %198 = vmatprep.subr.mxu0 0.0
    %199 = vmatpush2.msra.mxu0 %v152
    %200 = vmatprep.subr.mxu0 0.0
    %201 = vmatpush2.msra.mxu0 %v151
    %202 = vmatprep.subr.mxu0 0.0
    %203 = vmatpush2.msra.mxu0 %v150
    %204 = vmatprep.subr.mxu0 0.0
    %205 = vmatpush2.msra.mxu0 %v149
    %206 = vmatprep.subr.mxu0 0.0
    %207 = vmatpush2.msra.mxu0 %v148
    %208 = vmatprep.subr.mxu0 0.0
    %209 = vmatpush2.msra.mxu0 %v147
    %210 = vmatprep.subr.mxu0 0.0
    %211 = vmatpush2.msra.mxu0 %v146
    %212 = vmatprep.subr.mxu0 0.0
    %213 = vmatpush2.msra.mxu0 %v145
    %214 = vmatprep.subr.mxu0 0.0
    %215 = vmatpush2.msra.mxu0 %v144
    %216 = vmatprep.subr.mxu0 0.0
    %217 = vmatpush2.msra.mxu0 %v143
    %218 = vmatprep.subr.mxu0 0.0
    %219 = vmatpush2.msra.mxu0 %v142
    %220 = vmatprep.subr.mxu0 0.0
    %221 = vmatpush2.msra.mxu0 %v141
    %222 = vmatprep.subr.mxu0 0.0
    %223 = vmatpush2.msra.mxu0 %v140
    %224 = vmatprep.mubr.f32.mxu0 %v123
    %225 = vmatmul.mubr.f32.gmra.mxu0 %v122
    %v226 = vpop.f32.mrf.mxu0
    %v227 = vadd.f32 %v159, %v226
    %v228 = vpop.f32.mrf.mxu0
    %229 = vdwg.mxu0
    %v230 = vmul.f32 %v227, 0.01
    %v231 = vmax.f32 %v227, %v230
    %v232 = vld [vmem:[%s3] sm:$0xff]
    %v233 = vld [vmem:[%s3 + $0x8] sm:$0xff]
    %v234 = vld [vmem:[%s3 + $0x10] sm:$0xff]
    %v235 = vld [vmem:[%s3 + $0x18] sm:$0xff]
    %v236 = vld [vmem:[%s3 + $0x20] sm:$0xff]
    %v237 = vld [vmem:[%s3 + $0x28] sm:$0xff]
    %v238 = vld [vmem:[%s3 + $0x30] sm:$0xff]
    %v239 = vld [vmem:[%s3 + $0x38] sm:$0xff]
    %v241 = vlaneseq
    %v242 = vshrl.u32 %v241, 7
    %v243 = vsub.s32 0, %v242
    %v244 = vrot.slane %v24, %v243
    %v245 = vlaneseq
    %v246 = vshrl.u32 %v245, 7
    %v247 = vsub.s32 1, %v246
    %v248 = vrot.slane %v24, %v247
    %v252 = vsel %vm45, %v231, 0
    %254 = vmatprep.subr.mxu0 0.0
    %255 = vmatpush1.msra.mxu0 0.0
    %256 = vmatprep.subr.mxu0 0.0
    %257 = vmatpush1.msra.mxu0 0.0
    %258 = vmatprep.subr.mxu0 0.0
    %259 = vmatpush1.msra.mxu0 0.0
    %260 = vmatprep.subr.mxu0 0.0
    %261 = vmatpush1.msra.mxu0 0.0
    %262 = vmatprep.subr.mxu0 0.0
    %263 = vmatpush1.msra.mxu0 0.0
    %264 = vmatprep.subr.mxu0 0.0
    %265 = vmatpush1.msra.mxu0 0.0
    %266 = vmatprep.subr.mxu0 0.0
    %267 = vmatpush1.msra.mxu0 0.0
    %268 = vmatprep.subr.mxu0 0.0
    %269 = vmatpush1.msra.mxu0 0.0
    %270 = vmatprep.subr.mxu0 0.0
    %271 = vmatpush1.msra.mxu0 0.0
    %272 = vmatprep.subr.mxu0 0.0
    %273 = vmatpush1.msra.mxu0 0.0
    %274 = vmatprep.subr.mxu0 0.0
    %275 = vmatpush1.msra.mxu0 0.0
    %276 = vmatprep.subr.mxu0 0.0
    %277 = vmatpush1.msra.mxu0 0.0
    %278 = vmatprep.subr.mxu0 %v239
    %279 = vmatpush1.msra.mxu0 %v238
    %280 = vmatprep.subr.mxu0 %v237
    %281 = vmatpush1.msra.mxu0 %v236
    %282 = vmatprep.subr.mxu0 %v235
    %283 = vmatpush1.msra.mxu0 %v234
    %284 = vmatprep.subr.mxu0 %v233
    %285 = vmatpush1.msra.mxu0 %v232
    %286 = vmatprep.subr.mxu0 0.0
    %287 = vmatpush2.msra.mxu0 0.0
    %288 = vmatprep.subr.mxu0 0.0
    %289 = vmatpush2.msra.mxu0 0.0
    %290 = vmatprep.subr.mxu0 0.0
    %291 = vmatpush2.msra.mxu0 0.0
    %292 = vmatprep.subr.mxu0 0.0
    %293 = vmatpush2.msra.mxu0 0.0
    %294 = vmatprep.subr.mxu0 0.0
    %295 = vmatpush2.msra.mxu0 0.0
    %296 = vmatprep.subr.mxu0 0.0
    %297 = vmatpush2.msra.mxu0 0.0
    %298 = vmatprep.subr.mxu0 0.0
    %299 = vmatpush2.msra.mxu0 0.0
    %300 = vmatprep.subr.mxu0 0.0
    %301 = vmatpush2.msra.mxu0 0.0
    %302 = vmatprep.subr.mxu0 0.0
    %303 = vmatpush2.msra.mxu0 0.0
    %304 = vmatprep.subr.mxu0 0.0
    %305 = vmatpush2.msra.mxu0 0.0
    %306 = vmatprep.subr.mxu0 0.0
    %307 = vmatpush2.msra.mxu0 0.0
    %308 = vmatprep.subr.mxu0 0.0
    %309 = vmatpush2.msra.mxu0 0.0
    %310 = vmatprep.subr.mxu0 0.0
    %311 = vmatpush2.msra.mxu0 0.0
    %312 = vmatprep.subr.mxu0 0.0
    %313 = vmatpush2.msra.mxu0 0.0
    %314 = vmatprep.subr.mxu0 0.0
    %315 = vmatpush2.msra.mxu0 0.0
    %316 = vmatprep.subr.mxu0 0.0
    %317 = vmatpush2.msra.mxu0 0.0
    %318 = vmatprep.mubr.f32.mxu0 0.0
    %319 = vmatmul.mubr.f32.gmra.mxu0 %v252
    %v320 = vpop.f32.mrf.mxu0
    %v321 = vadd.f32 %v244, %v320
    %v322 = vpop.f32.mrf.mxu0
    %v323 = vadd.f32 %v248, %v322
    %324 = vdwg.mxu0
    %v325 = vmul.f32 %v321, 0.01
    %v326 = vmul.f32 %v323, 0.01
    %v327 = vmax.f32 %v321, %v325
    %v328 = vmax.f32 %v323, %v326
    %v331 = vcombine.low %v327, %v328
    %v333 = vunpack.c.l.s4 1983009808
    %v334 = vunpack.c.0.s8 %v333
    %v335 = vlaneseq
    %v336 = vshrl.u32 %v335, 7
    %v337 = vsub.s32 %v334, %v336
    %v338 = vrot.slane %v331, %v337
    %340 = vst [vmem:[#allocation2] sm:$0xf] %v338
    // Predicated region
    $region22: #{tpu_custom_call.1} parent=1 // pred_check
      _
    $region23: #{tpu_custom_call.1} parent=1 // pred_check_branch
      %342 = sbr.rel (0) target = $region25
    $region24: #{tpu_custom_call.1} parent=1 // pred_region
      %s344 = ssub.s32 64, 64
      %345 = vsyncadd [#allocation3], %s344
      %s347 = sshll.u32 [#allocation2], 4
      %s348 = int_to_ptr.vmem [resolvable:$true] %s347
      %350 = dma.vmem_to_hbm [thread:$0]  %s348, 64, %s5, [#allocation3]
    $region25: #{tpu_custom_call.1} parent=1 // pred_fallthru
      _
    // Predicated region
    $region26: #{tpu_custom_call.1} parent=1 // pred_check
      _
    $region27: #{tpu_custom_call.1} parent=1 // pred_check_branch
      %352 = sbr.rel (0) target = $region29
    $region28: #{tpu_custom_call.1} parent=1 // pred_region
      %353 = dma.done [#allocation3], 64
    $region29: #{tpu_custom_call.1} parent=1 // pred_fallthru
      _
    %354 = vsyncpa [#allocation3], 1

</llo_original>
